<compile_context>
chip_gen: v7x
topology: tpu7x:2x2x1
jax: 0.10.0
libtpu: 0.0.40
codegen_flags: <defaults>
</compile_context>

<pallas_src>
import functools
import math

import jax
import jax.numpy as jnp
from jax import lax
from jax.experimental import pallas as pl
from jax.experimental.pallas import tpu as pltpu


def _round_up(a, b):
    return (a + b - 1) // b * b


def _gelu(x, approx):
    if approx:
        # tanh approximation: transcendental runs on the (otherwise idle) EUP slot
        return jax.nn.gelu(x, approximate=True)
    # nn.GELU(approximate='none'): 0.5 * x * (1 + erf(x / sqrt(2)))
    return 0.5 * x * (1.0 + lax.erf(x * (1.0 / math.sqrt(2.0))))


def _local_integration_kernel(x_ref, xl_ref, xr_ref, w1_ref, b1_ref, w2_ref,
                              b2_ref, w3_ref, b3_ref, o_ref, *,
                              l_real, tile_l, n_tiles, b_blk, gelu_approx):
    i = pl.program_id(1)

    w1 = w1_ref[...]                       # (M_pad, C_pad)
    b1 = b1_ref[...]                       # (M_pad, 1)
    w2a = w2_ref[:, 0:1]                   # depthwise taps, hoisted
    w2b = w2_ref[:, 1:2]
    w2c = w2_ref[:, 2:3]
    b2 = b2_ref[...]
    w3 = w3_ref[...]                       # (C_pad, M_pad)
    b3 = b3_ref[...]

    m_pad = w1.shape[0]
    lane = lax.broadcasted_iota(jnp.int32, (m_pad, tile_l), 1)
    up_sel = lane == 0
    if n_tiles * tile_l != l_real:
        # Only the dn tap of the last real column ever reads a padded y1 column;
        # fold that fix-up into the boundary select (y1r is already 0 on the last
        # tile) instead of masking every padded lane of y1 on every tile.
        dn_sel = (lane == tile_l - 1) | (i * tile_l + lane >= l_real - 1)
    else:
        dn_sel = lane == tile_l - 1

    # at the true sequence ends the depthwise conv zero-pads its input (y1)
    left_valid = (i > 0).astype(jnp.float32)
    right_valid = (i < n_tiles - 1).astype(jnp.float32)

    for b in range(b_blk):                 # static unroll over the batch sub-block
        x = x_ref[b]                       # (C_pad, TILE_L)  channels x sequence

        # ---- pointwise Conv1d(dim -> mid_dim, ks=1): one MXU matmul + GELU ----
        y1 = jnp.dot(w1, x, preferred_element_type=jnp.float32) + b1
        y1 = _gelu(y1, gelu_approx)

        # ---- halo columns x[:, i*T-1] / x[:, (i+1)*T]: single-column dots ----
        y1l = jnp.dot(w1, xl_ref[b, :, 127:128],
                      preferred_element_type=jnp.float32) + b1
        y1r = jnp.dot(w1, xr_ref[b, :, 0:1],
                      preferred_element_type=jnp.float32) + b1
        y1l = _gelu(y1l, gelu_approx) * left_valid
        y1r = _gelu(y1r, gelu_approx) * right_valid

        # ---- depthwise Conv1d(k=3, s=1, p=1, groups=mid_dim) along lanes ----
        up = pltpu.roll(y1, 1, 1)                      # up[:, l] = y1[:, l-1]
        up = jnp.where(up_sel, jnp.broadcast_to(y1l, up.shape), up)
        dn = pltpu.roll(y1, tile_l - 1, 1)             # dn[:, l] = y1[:, l+1]
        dn = jnp.where(dn_sel, jnp.broadcast_to(y1r, dn.shape), dn)
        y2 = jnp.maximum(up * w2a + y1 * w2b + dn * w2c + b2, 0.0)   # ReLU

        # ---- pointwise Conv1d(mid_dim -> dim, ks=1) ----
        y3 = jnp.dot(w3, y2.astype(w3.dtype),
                     preferred_element_type=jnp.float32) + b3
        o_ref[b] = y3.astype(o_ref.dtype)


def _vmem_config():
    """Generation-aware VMEM limit, max sequence tile, and per-step VMEM budget."""
    cap = 64 * 1024 * 1024                       # conservative fallback (v7x-class TC)
    try:
        info = pltpu.get_tpu_info()
        cap = int(getattr(info, "vmem_capacity_bytes", cap) or cap)
    except Exception:
        pass
    # leave headroom for Mosaic-internal scratch / semaphores
    vmem_limit = max(32 * 1024 * 1024, min(cap - 16 * 1024 * 1024, 100 * 1024 * 1024))
    if cap <= 64 * 1024 * 1024:                  # v7x: 64 MiB per TensorCore
        tl_max, budget = 1024, 24 * 1024 * 1024
    else:                                        # v5e / v6e: 128 MiB
        tl_max, budget = 2048, 48 * 1024 * 1024
    return vmem_limit, tl_max, budget


def _choose_tile_l(L, c_pad, m_pad, *, b_blk, tl_max, vmem_budget,
                   weight_buf_count, x_itemsize, out_itemsize):
    """Largest multiple-of-128 sequence tile keeping estimated VMEM within budget."""
    tl = min(tl_max, _round_up(L, 128))
    resident_weights = weight_buf_count * 4 * (2 * m_pad * c_pad      # w1 + w3
                                               + 3 * m_pad            # w2
                                               + 2 * m_pad + c_pad)   # b1, b2, b3

    def est(t):
        x_blocks = 2 * b_blk * c_pad * (t + 2 * 128) * x_itemsize     # tile + halos, 2x buffered
        out_blocks = 2 * b_blk * c_pad * t * out_itemsize             # double-buffered output
        temps = 4 * t * (6 * m_pad + c_pad)                           # y1/up/dn/y2/iota/... + y3
        return resident_weights + x_blocks + out_blocks + temps

    while tl > 128 and est(tl) > vmem_budget:
        tl -= 128
    return tl


def _weight_spec(shape, *, single_buffer):
    index_map = lambda b, i: (0,) * len(shape)
    if single_buffer:
        # grid-invariant blocks: one resident VMEM buffer instead of the default two
        try:
            return pl.BlockSpec(shape, index_map, pipeline_mode=pl.Buffered(1))
        except Exception:
            pass  # older JAX without pipeline_mode/Buffered -> default double-buffering
    return pl.BlockSpec(shape, index_map)


def local_integration(x_ncl, params, *, tile_l=None, matmul_dtype=None,
                      gelu_approx=False):
    """x_ncl: (B, C, L) float32, matching the PyTorch Conv1d convention.

    matmul_dtype=jnp.bfloat16 feeds bf16 operands to the MXU (f32 accumulation and
    f32 elementwise path) -- opt-in, since it diverges slightly from PyTorch f32.
    """
    w1, b1, w2, b2, w3, b3 = params        # w1:(M,C)  w2:(M,3)  w3:(C,M)
    B, C, L = x_ncl.shape
    M = w1.shape[0]

    c_pad = _round_up(C, 8)
    m_pad = _round_up(M, 8)

    vmem_limit, tl_max, vmem_budget = _vmem_config()

    # Batch sub-block for small contraction dims: amortizes the ~0.35us/step
    # pipeline overhead and the small per-step DMAs when the MXU is underfilled.
    b_blk = 1
    if c_pad < 128 and m_pad < 128:
        for cand in (8, 4, 2):
            if B % cand == 0:
                b_blk = cand
                break

    # single-buffer the grid-invariant weights once they are big enough to matter
    single_buffer_weights = 4 * 2 * m_pad * c_pad >= (1 << 20)

    x_itemsize = 2 if matmul_dtype == jnp.bfloat16 else jnp.dtype(x_ncl.dtype).itemsize
    out_itemsize = jnp.dtype(x_ncl.dtype).itemsize
    tl = tile_l if tile_l is not None else _choose_tile_l(
        L, c_pad, m_pad, b_blk=b_blk, tl_max=tl_max, vmem_budget=vmem_budget,
        weight_buf_count=1 if single_buffer_weights else 2,
        x_itemsize=x_itemsize, out_itemsize=out_itemsize)
    assert tl % 128 == 0, "tile_l must be a multiple of 128"
    n_tiles = -(-L // tl)

    # keep >= 2 grid points so dual-TC chips (v7x megacore) are not half idle
    if (B // b_blk) * n_tiles < 2:
        if b_blk > 1 and B > 1:
            while b_blk > 1 and B // b_blk < 2:
                b_blk //= 2
        elif tile_l is None and L > 128:
            tl = max(128, _round_up(-(-L // 2), 128))
            n_tiles = -(-L // tl)

    l_pad = n_tiles * tl
    tl_blocks = tl // 128
    n_lane_blocks = l_pad // 128

    # pads are no-ops (elided by XLA) when C, L are already aligned
    x_p = jnp.pad(x_ncl, ((0, 0), (0, c_pad - C), (0, l_pad - L)))
    w1_p = jnp.pad(w1, ((0, m_pad - M), (0, c_pad - C)))
    b1_p = jnp.pad(b1, (0, m_pad - M))[:, None]
    w2_p = jnp.pad(w2, ((0, m_pad - M), (0, 0)))
    b2_p = jnp.pad(b2, (0, m_pad - M))[:, None]
    w3_p = jnp.pad(w3, ((0, c_pad - C), (0, m_pad - M)))
    b3_p = jnp.pad(b3, (0, c_pad - C))[:, None]

    if matmul_dtype is not None:
        x_p = x_p.astype(matmul_dtype)
        w1_p = w1_p.astype(matmul_dtype)
        w3_p = w3_p.astype(matmul_dtype)

    kernel = functools.partial(_local_integration_kernel, l_real=L, tile_l=tl,
                               n_tiles=n_tiles, b_blk=b_blk, gelu_approx=gelu_approx)
    wspec = functools.partial(_weight_spec, single_buffer=single_buffer_weights)

    # honest cost estimate: main work plus the per-tile halo recompute / reload
    flops = 4 * B * L * C * M + 8 * B * L * M + 4 * B * n_tiles * M * C
    transcendentals = B * L * M + 2 * B * n_tiles * M
    bytes_accessed = (x_itemsize * B * C * (L + 2 * n_tiles * 128)
                      + out_itemsize * B * C * L
                      + 4 * int(w1.size + w2.size + w3.size
                                + b1.size + b2.size + b3.size))

    out_p = pl.pallas_call(
        kernel,
        out_shape=jax.ShapeDtypeStruct((B, c_pad, l_pad), x_ncl.dtype),
        grid=(B // b_blk, n_tiles),
        in_specs=[
            # main sequence tile
            pl.BlockSpec((b_blk, c_pad, tl), lambda b, i: (b, 0, i)),
            # left / right halo lane-blocks (clamped; gated in-kernel at seq ends)
            pl.BlockSpec((b_blk, c_pad, 128),
                         lambda b, i: (b, 0, jnp.maximum(i * tl_blocks - 1, 0))),
            pl.BlockSpec((b_blk, c_pad, 128),
                         lambda b, i: (b, 0, jnp.minimum((i + 1) * tl_blocks,
                                                         n_lane_blocks - 1))),
            # weights / biases: grid-invariant, single-buffered when large
            wspec((m_pad, c_pad)),
            wspec((m_pad, 1)),
            wspec((m_pad, 3)),
            wspec((m_pad, 1)),
            wspec((c_pad, m_pad)),
            wspec((c_pad, 1)),
        ],
        out_specs=pl.BlockSpec((b_blk, c_pad, tl), lambda b, i: (b, 0, i)),
        compiler_params=pltpu.CompilerParams(
            dimension_semantics=("parallel", "parallel"),
            vmem_limit_bytes=vmem_limit,
        ),
        cost_estimate=pl.CostEstimate(flops=int(flops),
                                      transcendentals=int(transcendentals),
                                      bytes_accessed=int(bytes_accessed)),
    )(x_p, x_p, x_p, w1_p, b1_p, w2_p, b2_p, w3_p, b3_p)

    return out_p[:, :C, :L]


def local_integration_ref(x_ncl, params):
    """Pure-JAX reference mirroring the PyTorch forward."""
    w1, b1, w2, b2, w3, b3 = params
    y1 = jnp.einsum("bcl,mc->bml", x_ncl, w1) + b1[None, :, None]
    y1 = 0.5 * y1 * (1.0 + lax.erf(y1 / math.sqrt(2.0)))
    y1p = jnp.pad(y1, ((0, 0), (0, 0), (1, 1)))
    y2 = (y1p[:, :, :-2] * w2[None, :, 0:1]
          + y1p[:, :, 1:-1] * w2[None, :, 1:2]
          + y1p[:, :, 2:] * w2[None, :, 2:3]) + b2[None, :, None]
    y2 = jnp.maximum(y2, 0.0)
    y3 = jnp.einsum("bml,cm->bcl", y2, w3) + b3[None, :, None]
    return y3


def init_params(key, dim, ratio=1):
    mid_dim = round(ratio * dim)
    ks = jax.random.split(key, 6)

    def u(k, shape, fan_in):
        bound = 1.0 / math.sqrt(fan_in)
        return jax.random.uniform(k, shape, jnp.float32, -bound, bound)

    w1 = u(ks[0], (mid_dim, dim), dim)        # Conv1d(dim, mid, 1) weight squeezed
    b1 = u(ks[1], (mid_dim,), dim)
    w2 = u(ks[2], (mid_dim, 3), 3)            # depthwise weight (mid, 1, 3) squeezed
    b2 = u(ks[3], (mid_dim,), 3)
    w3 = u(ks[4], (dim, mid_dim), mid_dim)    # Conv1d(mid, dim, 1) weight squeezed
    b3 = u(ks[5], (dim,), mid_dim)
    return (w1, b1, w2, b2, w3, b3)


if __name__ == "__main__":
    key = jax.random.PRNGKey(0)
    kx, kp, kx2 = jax.random.split(key, 3)

    # small demo shape (batch=2, channels=4, length=16)
    B, C, L = 2, 4, 16
    x = jax.random.normal(kx, (B, C, L), jnp.float32)
    params = init_params(kp, dim=C, ratio=1)
    ref = local_integration_ref(x, params)

    out = jax.block_until_ready(local_integration(x, params))
    assert out.shape == (B, C, L)
    assert jnp.allclose(out, ref, atol=2e-5, rtol=2e-5), "mismatch vs reference"

    # multi-tile path: halo exchange + in-kernel batch sub-block + seq padding
    L2 = 300
    x2 = jax.random.normal(kx2, (B, C, L2), jnp.float32)
    ref2 = local_integration_ref(x2, params)
    out2 = jax.block_until_ready(local_integration(x2, params, tile_l=128))
    assert jnp.allclose(out2, ref2, atol=2e-5, rtol=2e-5), "mismatch vs reference (tiled)"

    # auto-chosen tile: single 384-wide tile, grid split over batch instead
    out3 = jax.block_until_ready(local_integration(x2, params))
    assert jnp.allclose(out3, ref2, atol=2e-5, rtol=2e-5), "mismatch vs reference (auto tile)"

    # opt-in bf16 MXU operands (f32 accumulate / elementwise), looser tolerance
    out_bf = jax.block_until_ready(
        local_integration(x, params, matmul_dtype=jnp.bfloat16))
    assert jnp.allclose(out_bf, ref, atol=5e-2, rtol=5e-2), "mismatch vs reference (bf16)"

    print("KERNEL_OK")
</pallas_src>

<mosaic_0001>
module attributes {stable_mosaic.version = 11 : i64} {
  func.func @_local_integration_kernel(%arg0: i32, %arg1: i32, %arg2: memref<1x8x128xf32, #tpu.memory_space<vmem>>, %arg3: memref<1x8x128xf32, #tpu.memory_space<vmem>>, %arg4: memref<1x8x128xf32, #tpu.memory_space<vmem>>, %arg5: memref<8x8xf32, #tpu.memory_space<vmem>>, %arg6: memref<8x1xf32, #tpu.memory_space<vmem>>, %arg7: memref<8x3xf32, #tpu.memory_space<vmem>>, %arg8: memref<8x1xf32, #tpu.memory_space<vmem>>, %arg9: memref<8x8xf32, #tpu.memory_space<vmem>>, %arg10: memref<8x1xf32, #tpu.memory_space<vmem>>, %arg11: memref<1x8x128xf32, #tpu.memory_space<vmem>>) attributes {dimension_semantics = [#tpu.dimension_semantics<parallel>, #tpu.dimension_semantics<parallel>], iteration_bounds = array<i64: 2, 1>, scalar_prefetch = 0 : i64, scratch_operands = 0 : i64, tpu.core_type = #tpu.core_type<tc>, window_params = [{transform_indices = @transform_0, window_bounds = array<i64: 1, 8, 128>}, {transform_indices = @transform_1, window_bounds = array<i64: 1, 8, 128>}, {transform_indices = @transform_2, window_bounds = array<i64: 1, 8, 128>}, {pipeline_mode = #tpu.pipeline_mode<synchronous>, transform_indices = @transform_3, window_bounds = array<i64: 8, 8>}, {pipeline_mode = #tpu.pipeline_mode<synchronous>, transform_indices = @transform_4, window_bounds = array<i64: 8, 1>}, {pipeline_mode = #tpu.pipeline_mode<synchronous>, transform_indices = @transform_5, window_bounds = array<i64: 8, 3>}, {pipeline_mode = #tpu.pipeline_mode<synchronous>, transform_indices = @transform_6, window_bounds = array<i64: 8, 1>}, {pipeline_mode = #tpu.pipeline_mode<synchronous>, transform_indices = @transform_7, window_bounds = array<i64: 8, 8>}, {pipeline_mode = #tpu.pipeline_mode<synchronous>, transform_indices = @transform_8, window_bounds = array<i64: 8, 1>}, {transform_indices = @transform_9, window_bounds = array<i64: 1, 8, 128>}]} {
    %c0 = arith.constant 0 : index
    %c0_0 = arith.constant 0 : index
    %0 = vector.load %arg5[%c0, %c0_0] : memref<8x8xf32, #tpu.memory_space<vmem>>, vector<8x8xf32>
    %c0_1 = arith.constant 0 : index
    %c0_2 = arith.constant 0 : index
    %1 = vector.load %arg6[%c0_1, %c0_2] : memref<8x1xf32, #tpu.memory_space<vmem>>, vector<8x1xf32>
    %c0_3 = arith.constant 0 : index
    %c0_4 = arith.constant 0 : index
    %2 = vector.load %arg7[%c0_3, %c0_4] : memref<8x3xf32, #tpu.memory_space<vmem>>, vector<8x1xf32>
    %c0_5 = arith.constant 0 : index
    %c1 = arith.constant 1 : index
    %3 = vector.load %arg7[%c0_5, %c1] : memref<8x3xf32, #tpu.memory_space<vmem>>, vector<8x1xf32>
    %c0_6 = arith.constant 0 : index
    %c2 = arith.constant 2 : index
    %4 = vector.load %arg7[%c0_6, %c2] : memref<8x3xf32, #tpu.memory_space<vmem>>, vector<8x1xf32>
    %c0_7 = arith.constant 0 : index
    %c0_8 = arith.constant 0 : index
    %5 = vector.load %arg8[%c0_7, %c0_8] : memref<8x1xf32, #tpu.memory_space<vmem>>, vector<8x1xf32>
    %c0_9 = arith.constant 0 : index
    %c0_10 = arith.constant 0 : index
    %6 = vector.load %arg9[%c0_9, %c0_10] : memref<8x8xf32, #tpu.memory_space<vmem>>, vector<8x8xf32>
    %c0_11 = arith.constant 0 : index
    %c0_12 = arith.constant 0 : index
    %7 = vector.load %arg10[%c0_11, %c0_12] : memref<8x1xf32, #tpu.memory_space<vmem>>, vector<8x1xf32>
    %8 = tpu.iota {dimensions = array<i32: 1>} : vector<8x128xi32>
    %c0_i32 = arith.constant 0 : i32
    %9 = vector.broadcast %c0_i32 : i32 to vector<8x128xi32>
    %10 = arith.cmpi eq, %8, %9 : vector<8x128xi32>
    %c127_i32 = arith.constant 127 : i32
    %11 = vector.broadcast %c127_i32 : i32 to vector<8x128xi32>
    %12 = arith.cmpi eq, %8, %11 : vector<8x128xi32>
    %c128_i32 = arith.constant 128 : i32
    %13 = arith.muli %arg1, %c128_i32 : i32
    %14 = vector.broadcast %13 : i32 to vector<8x128xi32>
    %15 = arith.addi %14, %8 : vector<8x128xi32>
    %c15_i32 = arith.constant 15 : i32
    %16 = vector.broadcast %c15_i32 : i32 to vector<8x128xi32>
    %17 = arith.cmpi sge, %15, %16 : vector<8x128xi32>
    %18 = arith.ori %12, %17 : vector<8x128xi1>
    %c0_i32_13 = arith.constant 0 : i32
    %19 = arith.cmpi sgt, %arg1, %c0_i32_13 : i32
    %20 = arith.extui %19 : i1 to i32
    %21 = arith.sitofp %20 : i32 to f32
    %c0_i32_14 = arith.constant 0 : i32
    %22 = arith.cmpi slt, %arg1, %c0_i32_14 : i32
    %23 = arith.extui %22 : i1 to i32
    %24 = arith.sitofp %23 : i32 to f32
    %c0_15 = arith.constant 0 : index
    %c0_16 = arith.constant 0 : index
    %c0_17 = arith.constant 0 : index
    %25 = vector.load %arg2[%c0_15, %c0_16, %c0_17] : memref<1x8x128xf32, #tpu.memory_space<vmem>>, vector<1x8x128xf32>
    %26 = vector.shape_cast %25 : vector<1x8x128xf32> to vector<8x128xf32>
    %cst = arith.constant dense<0.000000e+00> : vector<8x128xf32>
    %27 = tpu.matmul %0, %26, %cst {dimension_numbers = #tpu.dot_dimension_numbers<[1], [0], [0], [1], [0, 0, 1, 1], [], []>} : vector<8x8xf32>, vector<8x128xf32>, vector<8x128xf32> -> vector<8x128xf32>
    %28 = vector.broadcast %1 : vector<8x1xf32> to vector<8x128xf32>
    %29 = arith.addf %27, %28 : vector<8x128xf32>
    %cst_18 = arith.constant 5.000000e-01 : f32
    %30 = vector.broadcast %cst_18 : f32 to vector<8x128xf32>
    %31 = arith.mulf %30, %29 : vector<8x128xf32>
    %cst_19 = arith.constant 0.707106769 : f32
    %32 = vector.broadcast %cst_19 : f32 to vector<8x128xf32>
    %33 = arith.mulf %29, %32 : vector<8x128xf32>
    %34 = math.erf %33 : vector<8x128xf32>
    %cst_20 = arith.constant 1.000000e+00 : f32
    %35 = vector.broadcast %cst_20 : f32 to vector<8x128xf32>
    %36 = arith.addf %35, %34 : vector<8x128xf32>
    %37 = arith.mulf %31, %36 : vector<8x128xf32>
    %c0_21 = arith.constant 0 : index
    %c0_22 = arith.constant 0 : index
    %c127 = arith.constant 127 : index
    %38 = vector.load %arg3[%c0_21, %c0_22, %c127] : memref<1x8x128xf32, #tpu.memory_space<vmem>>, vector<1x8x1xf32>
    %39 = vector.shape_cast %38 : vector<1x8x1xf32> to vector<8x1xf32>
    %cst_23 = arith.constant dense<0.000000e+00> : vector<8x1xf32>
    %40 = tpu.matmul %0, %39, %cst_23 {dimension_numbers = #tpu.dot_dimension_numbers<[1], [0], [0], [1], [0, 0, 1, 1], [], []>} : vector<8x8xf32>, vector<8x1xf32>, vector<8x1xf32> -> vector<8x1xf32>
    %41 = arith.addf %40, %1 : vector<8x1xf32>
    %c0_24 = arith.constant 0 : index
    %c0_25 = arith.constant 0 : index
    %c0_26 = arith.constant 0 : index
    %42 = vector.load %arg4[%c0_24, %c0_25, %c0_26] : memref<1x8x128xf32, #tpu.memory_space<vmem>>, vector<1x8x1xf32>
    %43 = vector.shape_cast %42 : vector<1x8x1xf32> to vector<8x1xf32>
    %cst_27 = arith.constant dense<0.000000e+00> : vector<8x1xf32>
    %44 = tpu.matmul %0, %43, %cst_27 {dimension_numbers = #tpu.dot_dimension_numbers<[1], [0], [0], [1], [0, 0, 1, 1], [], []>} : vector<8x8xf32>, vector<8x1xf32>, vector<8x1xf32> -> vector<8x1xf32>
    %45 = arith.addf %44, %1 : vector<8x1xf32>
    %cst_28 = arith.constant 5.000000e-01 : f32
    %46 = vector.broadcast %cst_28 : f32 to vector<8x1xf32>
    %47 = arith.mulf %46, %41 : vector<8x1xf32>
    %cst_29 = arith.constant 0.707106769 : f32
    %48 = vector.broadcast %cst_29 : f32 to vector<8x1xf32>
    %49 = arith.mulf %41, %48 : vector<8x1xf32>
    %50 = math.erf %49 : vector<8x1xf32>
    %cst_30 = arith.constant 1.000000e+00 : f32
    %51 = vector.broadcast %cst_30 : f32 to vector<8x1xf32>
    %52 = arith.addf %51, %50 : vector<8x1xf32>
    %53 = arith.mulf %47, %52 : vector<8x1xf32>
    %54 = vector.broadcast %21 : f32 to vector<8x1xf32>
    %55 = arith.mulf %53, %54 : vector<8x1xf32>
    %cst_31 = arith.constant 5.000000e-01 : f32
    %56 = vector.broadcast %cst_31 : f32 to vector<8x1xf32>
    %57 = arith.mulf %56, %45 : vector<8x1xf32>
    %cst_32 = arith.constant 0.707106769 : f32
    %58 = vector.broadcast %cst_32 : f32 to vector<8x1xf32>
    %59 = arith.mulf %45, %58 : vector<8x1xf32>
    %60 = math.erf %59 : vector<8x1xf32>
    %cst_33 = arith.constant 1.000000e+00 : f32
    %61 = vector.broadcast %cst_33 : f32 to vector<8x1xf32>
    %62 = arith.addf %61, %60 : vector<8x1xf32>
    %63 = arith.mulf %57, %62 : vector<8x1xf32>
    %64 = vector.broadcast %24 : f32 to vector<8x1xf32>
    %65 = arith.mulf %63, %64 : vector<8x1xf32>
    %c1_i32 = arith.constant 1 : i32
    %66 = tpu.dynamic_rotate %37 by %c1_i32 dim 1 : vector<8x128xf32>, i32 -> vector<8x128xf32>
    %67 = vector.shape_cast %55 : vector<8x1xf32> to vector<8x1xf32>
    %68 = vector.broadcast %67 : vector<8x1xf32> to vector<8x128xf32>
    %69 = arith.select %10, %68, %66 : vector<8x128xi1>, vector<8x128xf32>
    %c127_i32_34 = arith.constant 127 : i32
    %70 = tpu.dynamic_rotate %37 by %c127_i32_34 dim 1 : vector<8x128xf32>, i32 -> vector<8x128xf32>
    %71 = vector.shape_cast %65 : vector<8x1xf32> to vector<8x1xf32>
    %72 = vector.broadcast %71 : vector<8x1xf32> to vector<8x128xf32>
    %73 = arith.select %18, %72, %70 : vector<8x128xi1>, vector<8x128xf32>
    %74 = vector.broadcast %2 : vector<8x1xf32> to vector<8x128xf32>
    %75 = arith.mulf %69, %74 : vector<8x128xf32>
    %76 = vector.broadcast %3 : vector<8x1xf32> to vector<8x128xf32>
    %77 = arith.mulf %37, %76 : vector<8x128xf32>
    %78 = arith.addf %75, %77 : vector<8x128xf32>
    %79 = vector.broadcast %4 : vector<8x1xf32> to vector<8x128xf32>
    %80 = arith.mulf %73, %79 : vector<8x128xf32>
    %81 = arith.addf %78, %80 : vector<8x128xf32>
    %82 = vector.broadcast %5 : vector<8x1xf32> to vector<8x128xf32>
    %83 = arith.addf %81, %82 : vector<8x128xf32>
    %cst_35 = arith.constant 0.000000e+00 : f32
    %84 = vector.broadcast %cst_35 : f32 to vector<8x128xf32>
    %85 = arith.maximumf %83, %84 : vector<8x128xf32>
    %cst_36 = arith.constant dense<0.000000e+00> : vector<8x128xf32>
    %86 = tpu.matmul %6, %85, %cst_36 {dimension_numbers = #tpu.dot_dimension_numbers<[1], [0], [0], [1], [0, 0, 1, 1], [], []>} : vector<8x8xf32>, vector<8x128xf32>, vector<8x128xf32> -> vector<8x128xf32>
    %87 = vector.broadcast %7 : vector<8x1xf32> to vector<8x128xf32>
    %88 = arith.addf %86, %87 : vector<8x128xf32>
    %c0_37 = arith.constant 0 : index
    %c0_38 = arith.constant 0 : index
    %c0_39 = arith.constant 0 : index
    %89 = vector.load %arg11[%c0_37, %c0_38, %c0_39] : memref<1x8x128xf32, #tpu.memory_space<vmem>>, vector<1x8x128xf32>
    %90 = vector.shape_cast %89 : vector<1x8x128xf32> to vector<8x128xf32>
    %91 = vector.shape_cast %88 : vector<8x128xf32> to vector<1x8x128xf32>
    tpu.vector_store %arg11[%c0_37, %c0_38, %c0_39], %91 {strides = array<i32>} : memref<1x8x128xf32, #tpu.memory_space<vmem>>, vector<1x8x128xf32>,
    return
  }
  func.func @transform_0(%arg0: i32, %arg1: i32) -> (i32, i32, i32) {
    %c0_i32 = arith.constant 0 : i32
    %c0_i32_0 = arith.constant 0 : i32
    return %arg0, %c0_i32, %arg1 : i32, i32, i32
  }
  func.func @transform_1(%arg0: i32, %arg1: i32) -> (i32, i32, i32) {
    %c1_i32 = arith.constant 1 : i32
    %0 = arith.muli %arg1, %c1_i32 : i32
    %c1_i32_0 = arith.constant 1 : i32
    %1 = arith.subi %0, %c1_i32_0 : i32
    %c0_i32 = arith.constant 0 : i32
    %2 = arith.maxsi %1, %c0_i32 : i32
    %c0_i32_1 = arith.constant 0 : i32
    %c0_i32_2 = arith.constant 0 : i32
    return %arg0, %c0_i32_1, %2 : i32, i32, i32
  }
  func.func @transform_2(%arg0: i32, %arg1: i32) -> (i32, i32, i32) {
    %c1_i32 = arith.constant 1 : i32
    %0 = arith.addi %arg1, %c1_i32 : i32
    %c1_i32_0 = arith.constant 1 : i32
    %1 = arith.muli %0, %c1_i32_0 : i32
    %c0_i32 = arith.constant 0 : i32
    %2 = arith.minsi %1, %c0_i32 : i32
    %c0_i32_1 = arith.constant 0 : i32
    %c0_i32_2 = arith.constant 0 : i32
    return %arg0, %c0_i32_1, %2 : i32, i32, i32
  }
  func.func @transform_3(%arg0: i32, %arg1: i32) -> (i32, i32) {
    %c0_i32 = arith.constant 0 : i32
    %c0_i32_0 = arith.constant 0 : i32
    %c0_i32_1 = arith.constant 0 : i32
    return %c0_i32, %c0_i32_0 : i32, i32
  }
  func.func @transform_4(%arg0: i32, %arg1: i32) -> (i32, i32) {
    %c0_i32 = arith.constant 0 : i32
    %c0_i32_0 = arith.constant 0 : i32
    %c0_i32_1 = arith.constant 0 : i32
    return %c0_i32, %c0_i32_0 : i32, i32
  }
  func.func @transform_5(%arg0: i32, %arg1: i32) -> (i32, i32) {
    %c0_i32 = arith.constant 0 : i32
    %c0_i32_0 = arith.constant 0 : i32
    %c0_i32_1 = arith.constant 0 : i32
    return %c0_i32, %c0_i32_0 : i32, i32
  }
  func.func @transform_6(%arg0: i32, %arg1: i32) -> (i32, i32) {
    %c0_i32 = arith.constant 0 : i32
    %c0_i32_0 = arith.constant 0 : i32
    %c0_i32_1 = arith.constant 0 : i32
    return %c0_i32, %c0_i32_0 : i32, i32
  }
  func.func @transform_7(%arg0: i32, %arg1: i32) -> (i32, i32) {
    %c0_i32 = arith.constant 0 : i32
    %c0_i32_0 = arith.constant 0 : i32
    %c0_i32_1 = arith.constant 0 : i32
    return %c0_i32, %c0_i32_0 : i32, i32
  }
  func.func @transform_8(%arg0: i32, %arg1: i32) -> (i32, i32) {
    %c0_i32 = arith.constant 0 : i32
    %c0_i32_0 = arith.constant 0 : i32
    %c0_i32_1 = arith.constant 0 : i32
    return %c0_i32, %c0_i32_0 : i32, i32
  }
  func.func @transform_9(%arg0: i32, %arg1: i32) -> (i32, i32, i32) {
    %c0_i32 = arith.constant 0 : i32
    %c0_i32_0 = arith.constant 0 : i32
    return %arg0, %c0_i32, %arg1 : i32, i32, i32
  }
}

</mosaic_0001>

<llo_original>
// kernel: tpu_custom_call.1
$region0: #{tpu_custom_call.1}
  #allocation0 [shape = 'u32[]', space=smem, size = 0x4, offset = 0x4, fixed_abs, tag = 'smem constant byte address 0x4 - core index']
  #allocation1 [shape = 'u32[144,128]{1,0:T(1,128)}', space=vmem, size = 0x12000, scoped, tag = 'internal scratch']
  %s0 = inlined_call_operand.vmem [shape: f32[2,8,128], index: 0, kind: input, shape index: {}]
  %s1 = inlined_call_operand.vmem [shape: f32[2,8,128], index: 1, kind: input, shape index: {}]
  %s2 = inlined_call_operand.hbm [shape: f32[2,8,128], index: 2, kind: input, shape index: {}]
  %s3 = inlined_call_operand.vmem [shape: f32[8,8], index: 3, kind: input, shape index: {}]
  %s4 = inlined_call_operand.vmem [shape: f32[8,1], index: 4, kind: input, shape index: {}]
  %s5 = inlined_call_operand.vmem [shape: f32[8,3], index: 5, kind: input, shape index: {}]
  %s6 = inlined_call_operand.vmem [shape: f32[8,1], index: 6, kind: input, shape index: {}]
  %s7 = inlined_call_operand.vmem [shape: f32[8,8], index: 7, kind: input, shape index: {}]
  %s8 = inlined_call_operand.vmem [shape: f32[8,1], index: 8, kind: input, shape index: {}]
  %s9 = inlined_call_operand.hbm [shape: f32[2,8,128], index: 9, kind: output, shape index: {}]
  %s10 = sld [smem:[#allocation0]]
  $region73: #{tpu_custom_call.1} parent=0
    _
  %s12 = ssub.s32 1, %s10
  %s13 = scalar_select 0, %s12, %s10
  $region1: #{tpu_custom_call.1} parent=0
    #allocation2 [shape = 'u8[8192]{0}', space=vmem, size = 0x2000, scoped, tag = 'input window, operand 2']
    #allocation3 [shape = 's32[2]{0}', space=sflag, size = 0x8, scoped, tag = 'scoped memory for tpu_custom_call.1']
    #allocation4 [shape = 's32[2]{0}', space=sflag, size = 0x8, scoped, tag = 'scoped memory for tpu_custom_call.1']
    #allocation5 [shape = 'u8[8192]{0}', space=vmem, size = 0x2000, scoped, tag = 'output window, operand 0']
    %14 = vsyncpa [#allocation3], 0
    %s15 = scalar_lea.sflag [#allocation3], 1
    %16 = vsyncpa %s15, 0
    %17 = vsyncpa [#allocation4], 0
    %s18 = scalar_lea.sflag [#allocation4], 1
    %19 = vsyncpa %s18, 0
    loop: start=0, step=1, limit=4
    $region2: #{tpu_custom_call.1} parent=1 // loop_pre_header
      _
    $region3: #{tpu_custom_call.1} parent=1 // loop_header
      %s21 = sphi 0, %s25
      %p22 = scmp.ge.s32.totalorder %s21, 4
      %s28 = sphi 0, %s40
      %s29 = sphi 0, %s36
      %s30 = sphi 0, %s28
      %s31 = sphi 0, %s29
      %s32 = sphi 0, %s30
      %s33 = sphi 0, %s31
      %s45 = sphi 0, %s47
      %s48 = sphi 0, %s45
      %s49 = sphi 0, %s48
      %s65 = sphi 0, %s49
      %s79 = sphi 0, %s81
      %s82 = sphi 0, %s79
      %s83 = sphi 0, %s82
      %s99 = sphi 0, %s83
      %s113 = sphi 0, %s115
      %s116 = sphi 0, %s113
      %s117 = sphi 0, %s116
      %s133 = sphi 0, %s117
      %s137 = sphi 0, %s137
      %s139 = sphi 0, %s137
      %s140 = sphi 0, %s139
      %s154 = sphi 0, %s140
      %s158 = sphi 0, %s158
      %s160 = sphi 0, %s158
      %s161 = sphi 0, %s160
      %s175 = sphi 0, %s161
      %s179 = sphi 0, %s179
      %s181 = sphi 0, %s179
      %s182 = sphi 0, %s181
      %s196 = sphi 0, %s182
      %s200 = sphi 0, %s200
      %s202 = sphi 0, %s200
      %s203 = sphi 0, %s202
      %s217 = sphi 0, %s203
      %s221 = sphi 0, %s221
      %s223 = sphi 0, %s221
      %s224 = sphi 0, %s223
      %s238 = sphi 0, %s224
      %s242 = sphi 0, %s242
      %s244 = sphi 0, %s242
      %s245 = sphi 0, %s244
      %s259 = sphi 0, %s245
      %s267 = sphi 0, %s269
      %s270 = sphi 0, %s267
      %s271 = sphi 0, %s270
      %s287 = sphi 0, %s271
    $region4: #{tpu_custom_call.1} parent=1 // loop_header_branch
      %24 = sbr.rel (%p22) target = $region8
    $region5: #{tpu_custom_call.1} parent=1 // loop_body
      %s26 = ssub.s32 %s21, 1
      %s27 = ssub.s32 %s21, 2
      %s34 = sadd.s32 1, %s29
      %p35 = scmp.ge.s32.totalorder %s34, 1
      %s36 = scalar_select %p35, 0, %s34
      %s37 = sadd.s32 1, %s28
      %s38 = scalar_select %p35, %s37, %s28
      %p39 = scmp.ge.s32.totalorder %s38, 2
      %s40 = scalar_select %p39, 0, %s38
      %s41 = ssub.s32 %s28, %s40
      %s42 = ssub.s32 %s29, %s36
      %s43 = sor.u32 %s41, %s42
      %p44 = scmp.eq.s32.totalorder %s43, 0
      %s46 = sadd.s32 %s45, 1
      %s47 = scalar_select %p44, %s45, %s46
      %p50 = pneg %p44
      %p51 = scmp.eq.s32.totalorder %s21, 1
      %p52 = por %p50, %p51
      %p53 = scmp.ne.s32.totalorder %s45, %s48
      %p54 = scmp.eq.s32.totalorder %s21, 0
      %p55 = por %p53, %p54
      %p56 = scmp.ne.s32.totalorder %s45, %s48
      %p57 = scmp.eq.s32.totalorder %s26, 1
      %p58 = por %p56, %p57
      %p59 = scmp.ne.s32.totalorder %s48, %s49
      %p60 = scmp.eq.s32.totalorder %s26, 0
      %p61 = por %p59, %p60
      %p62 = scmp.ne.s32.totalorder %s48, %s49
      %p63 = scmp.eq.s32.totalorder %s27, 1
      %p64 = por %p62, %p63
      %p66 = scmp.ne.s32.totalorder %s49, %s65
      %p67 = scmp.eq.s32.totalorder %s27, 0
      %p68 = por %p66, %p67
      %s69 = ssub.s32 %s29, 1
      %p70 = scmp.gt.s32.totalorder %s69, 0
      %s71 = scalar_select %p70, %s69, 0
      %s72 = ssub.s32 %s36, 1
      %p73 = scmp.gt.s32.totalorder %s72, 0
      %s74 = scalar_select %p73, %s72, 0
      %s75 = ssub.s32 %s28, %s40
      %s76 = ssub.s32 %s71, %s74
      %s77 = sor.u32 %s75, %s76
      %p78 = scmp.eq.s32.totalorder %s77, 0
      %s80 = sadd.s32 %s79, 1
      %s81 = scalar_select %p78, %s79, %s80
      %p84 = pneg %p78
      %p85 = scmp.eq.s32.totalorder %s21, 1
      %p86 = por %p84, %p85
      %p87 = scmp.ne.s32.totalorder %s79, %s82
      %p88 = scmp.eq.s32.totalorder %s21, 0
      %p89 = por %p87, %p88
      %p90 = scmp.ne.s32.totalorder %s79, %s82
      %p91 = scmp.eq.s32.totalorder %s26, 1
      %p92 = por %p90, %p91
      %p93 = scmp.ne.s32.totalorder %s82, %s83
      %p94 = scmp.eq.s32.totalorder %s26, 0
      %p95 = por %p93, %p94
      %p96 = scmp.ne.s32.totalorder %s82, %s83
      %p97 = scmp.eq.s32.totalorder %s27, 1
      %p98 = por %p96, %p97
      %p100 = scmp.ne.s32.totalorder %s83, %s99
      %p101 = scmp.eq.s32.totalorder %s27, 0
      %p102 = por %p100, %p101
      %s103 = sadd.s32 %s29, 1
      %p104 = scmp.lt.s32.totalorder %s103, 0
      %s105 = scalar_select %p104, %s103, 0
      %s106 = sadd.s32 %s36, 1
      %p107 = scmp.lt.s32.totalorder %s106, 0
      %s108 = scalar_select %p107, %s106, 0
      %s109 = ssub.s32 %s28, %s40
      %s110 = ssub.s32 %s105, %s108
      %s111 = sor.u32 %s109, %s110
      %p112 = scmp.eq.s32.totalorder %s111, 0
      %s114 = sadd.s32 %s113, 1
      %s115 = scalar_select %p112, %s113, %s114
      %p118 = pneg %p112
      %p119 = scmp.eq.s32.totalorder %s21, 1
      %p120 = por %p118, %p119
      %p121 = scmp.ne.s32.totalorder %s113, %s116
      %p122 = scmp.eq.s32.totalorder %s21, 0
      %p123 = por %p121, %p122
      %p124 = scmp.ne.s32.totalorder %s113, %s116
      %p125 = scmp.eq.s32.totalorder %s26, 1
      %p126 = por %p124, %p125
      %p127 = scmp.ne.s32.totalorder %s116, %s117
      %p128 = scmp.eq.s32.totalorder %s26, 0
      %p129 = por %p127, %p128
      %p130 = scmp.ne.s32.totalorder %s116, %s117
      %p131 = scmp.eq.s32.totalorder %s27, 1
      %p132 = por %p130, %p131
      %p134 = scmp.ne.s32.totalorder %s117, %s133
      %p135 = scmp.eq.s32.totalorder %s27, 0
      %p136 = por %p134, %p135
      %s138 = sadd.s32 %s137, 1
      %p141 = scmp.eq.s32.totalorder %s21, 1
      %p142 = scmp.ne.s32.totalorder %s137, %s139
      %p143 = scmp.eq.s32.totalorder %s21, 0
      %p144 = por %p142, %p143
      %p145 = scmp.ne.s32.totalorder %s137, %s139
      %p146 = scmp.eq.s32.totalorder %s26, 1
      %p147 = por %p145, %p146
      %p148 = scmp.ne.s32.totalorder %s139, %s140
      %p149 = scmp.eq.s32.totalorder %s26, 0
      %p150 = por %p148, %p149
      %p151 = scmp.ne.s32.totalorder %s139, %s140
      %p152 = scmp.eq.s32.totalorder %s27, 1
      %p153 = por %p151, %p152
      %p155 = scmp.ne.s32.totalorder %s140, %s154
      %p156 = scmp.eq.s32.totalorder %s27, 0
      %p157 = por %p155, %p156
      %s159 = sadd.s32 %s158, 1
      %p162 = scmp.eq.s32.totalorder %s21, 1
      %p163 = scmp.ne.s32.totalorder %s158, %s160
      %p164 = scmp.eq.s32.totalorder %s21, 0
      %p165 = por %p163, %p164
      %p166 = scmp.ne.s32.totalorder %s158, %s160
      %p167 = scmp.eq.s32.totalorder %s26, 1
      %p168 = por %p166, %p167
      %p169 = scmp.ne.s32.totalorder %s160, %s161
      %p170 = scmp.eq.s32.totalorder %s26, 0
      %p171 = por %p169, %p170
      %p172 = scmp.ne.s32.totalorder %s160, %s161
      %p173 = scmp.eq.s32.totalorder %s27, 1
      %p174 = por %p172, %p173
      %p176 = scmp.ne.s32.totalorder %s161, %s175
      %p177 = scmp.eq.s32.totalorder %s27, 0
      %p178 = por %p176, %p177
      %s180 = sadd.s32 %s179, 1
      %p183 = scmp.eq.s32.totalorder %s21, 1
      %p184 = scmp.ne.s32.totalorder %s179, %s181
      %p185 = scmp.eq.s32.totalorder %s21, 0
      %p186 = por %p184, %p185
      %p187 = scmp.ne.s32.totalorder %s179, %s181
      %p188 = scmp.eq.s32.totalorder %s26, 1
      %p189 = por %p187, %p188
      %p190 = scmp.ne.s32.totalorder %s181, %s182
      %p191 = scmp.eq.s32.totalorder %s26, 0
      %p192 = por %p190, %p191
      %p193 = scmp.ne.s32.totalorder %s181, %s182
      %p194 = scmp.eq.s32.totalorder %s27, 1
      %p195 = por %p193, %p194
      %p197 = scmp.ne.s32.totalorder %s182, %s196
      %p198 = scmp.eq.s32.totalorder %s27, 0
      %p199 = por %p197, %p198
      %s201 = sadd.s32 %s200, 1
      %p204 = scmp.eq.s32.totalorder %s21, 1
      %p205 = scmp.ne.s32.totalorder %s200, %s202
      %p206 = scmp.eq.s32.totalorder %s21, 0
      %p207 = por %p205, %p206
      %p208 = scmp.ne.s32.totalorder %s200, %s202
      %p209 = scmp.eq.s32.totalorder %s26, 1
      %p210 = por %p208, %p209
      %p211 = scmp.ne.s32.totalorder %s202, %s203
      %p212 = scmp.eq.s32.totalorder %s26, 0
      %p213 = por %p211, %p212
      %p214 = scmp.ne.s32.totalorder %s202, %s203
      %p215 = scmp.eq.s32.totalorder %s27, 1
      %p216 = por %p214, %p215
      %p218 = scmp.ne.s32.totalorder %s203, %s217
      %p219 = scmp.eq.s32.totalorder %s27, 0
      %p220 = por %p218, %p219
      %s222 = sadd.s32 %s221, 1
      %p225 = scmp.eq.s32.totalorder %s21, 1
      %p226 = scmp.ne.s32.totalorder %s221, %s223
      %p227 = scmp.eq.s32.totalorder %s21, 0
      %p228 = por %p226, %p227
      %p229 = scmp.ne.s32.totalorder %s221, %s223
      %p230 = scmp.eq.s32.totalorder %s26, 1
      %p231 = por %p229, %p230
      %p232 = scmp.ne.s32.totalorder %s223, %s224
      %p233 = scmp.eq.s32.totalorder %s26, 0
      %p234 = por %p232, %p233
      %p235 = scmp.ne.s32.totalorder %s223, %s224
      %p236 = scmp.eq.s32.totalorder %s27, 1
      %p237 = por %p235, %p236
      %p239 = scmp.ne.s32.totalorder %s224, %s238
      %p240 = scmp.eq.s32.totalorder %s27, 0
      %p241 = por %p239, %p240
      %s243 = sadd.s32 %s242, 1
      %p246 = scmp.eq.s32.totalorder %s21, 1
      %p247 = scmp.ne.s32.totalorder %s242, %s244
      %p248 = scmp.eq.s32.totalorder %s21, 0
      %p249 = por %p247, %p248
      %p250 = scmp.ne.s32.totalorder %s242, %s244
      %p251 = scmp.eq.s32.totalorder %s26, 1
      %p252 = por %p250, %p251
      %p253 = scmp.ne.s32.totalorder %s244, %s245
      %p254 = scmp.eq.s32.totalorder %s26, 0
      %p255 = por %p253, %p254
      %p256 = scmp.ne.s32.totalorder %s244, %s245
      %p257 = scmp.eq.s32.totalorder %s27, 1
      %p258 = por %p256, %p257
      %p260 = scmp.ne.s32.totalorder %s245, %s259
      %p261 = scmp.eq.s32.totalorder %s27, 0
      %p262 = por %p260, %p261
      %s263 = ssub.s32 %s28, %s40
      %s264 = ssub.s32 %s29, %s36
      %s265 = sor.u32 %s263, %s264
      %p266 = scmp.eq.s32.totalorder %s265, 0
      %s268 = sadd.s32 %s267, 1
      %s269 = scalar_select %p266, %s267, %s268
      %p272 = pneg %p266
      %p273 = scmp.eq.s32.totalorder %s21, 1
      %p274 = por %p272, %p273
      %p275 = scmp.ne.s32.totalorder %s267, %s270
      %p276 = scmp.eq.s32.totalorder %s21, 0
      %p277 = por %p275, %p276
      %p278 = scmp.ne.s32.totalorder %s267, %s270
      %p279 = scmp.eq.s32.totalorder %s26, 1
      %p280 = por %p278, %p279
      %p281 = scmp.ne.s32.totalorder %s270, %s271
      %p282 = scmp.eq.s32.totalorder %s26, 0
      %p283 = por %p281, %p282
      %p284 = scmp.ne.s32.totalorder %s270, %s271
      %p285 = scmp.eq.s32.totalorder %s27, 1
      %p286 = por %p284, %p285
      %p288 = scmp.ne.s32.totalorder %s271, %s287
      %p289 = scmp.eq.s32.totalorder %s27, 0
      %p290 = por %p288, %p289
      %p291 = scmp.le.s32.totalorder 1, %s21
      %p292 = scmp.lt.s32.totalorder %s21, 3
      %p293 = pnand %p291, %p292
      %p294 = pneg %p293
      // Predicated region
      $region9: #{tpu_custom_call.1} parent=5 // pred_check
        _
      $region10: #{tpu_custom_call.1} parent=5 // pred_check_branch
        %296 = sbr.rel (%p293) target = $region12
      $region11: #{tpu_custom_call.1} parent=5 // pred_region
        %s297 = ssub.s32 %s21, 1
        // Predicated region
        $region13: #{tpu_custom_call.1} parent=11 // pred_check
          %p298 = pneg %p150
        $region14: #{tpu_custom_call.1} parent=11 // pred_check_branch
          %300 = sbr.rel (%p298) target = $region16
        $region15: #{tpu_custom_call.1} parent=11 // pred_region
          _
        $region16: #{tpu_custom_call.1} parent=11 // pred_fallthru
          _
        // Predicated region
        $region17: #{tpu_custom_call.1} parent=11 // pred_check
          %p301 = pneg %p171
        $region18: #{tpu_custom_call.1} parent=11 // pred_check_branch
          %303 = sbr.rel (%p301) target = $region20
        $region19: #{tpu_custom_call.1} parent=11 // pred_region
          _
        $region20: #{tpu_custom_call.1} parent=11 // pred_fallthru
          _
        // Predicated region
        $region21: #{tpu_custom_call.1} parent=11 // pred_check
          %p304 = pneg %p192
        $region22: #{tpu_custom_call.1} parent=11 // pred_check_branch
          %306 = sbr.rel (%p304) target = $region24
        $region23: #{tpu_custom_call.1} parent=11 // pred_region
          _
        $region24: #{tpu_custom_call.1} parent=11 // pred_fallthru
          _
        // Predicated region
        $region25: #{tpu_custom_call.1} parent=11 // pred_check
          %p307 = pneg %p213
        $region26: #{tpu_custom_call.1} parent=11 // pred_check_branch
          %309 = sbr.rel (%p307) target = $region28
        $region27: #{tpu_custom_call.1} parent=11 // pred_region
          _
        $region28: #{tpu_custom_call.1} parent=11 // pred_fallthru
          _
        // Predicated region
        $region29: #{tpu_custom_call.1} parent=11 // pred_check
          %p310 = pneg %p234
        $region30: #{tpu_custom_call.1} parent=11 // pred_check_branch
          %312 = sbr.rel (%p310) target = $region32
        $region31: #{tpu_custom_call.1} parent=11 // pred_region
          _
        $region32: #{tpu_custom_call.1} parent=11 // pred_fallthru
          _
        // Predicated region
        $region33: #{tpu_custom_call.1} parent=11 // pred_check
          %p313 = pneg %p255
        $region34: #{tpu_custom_call.1} parent=11 // pred_check_branch
          %315 = sbr.rel (%p313) target = $region36
        $region35: #{tpu_custom_call.1} parent=11 // pred_region
          _
        $region36: #{tpu_custom_call.1} parent=11 // pred_fallthru
          _
      $region12: #{tpu_custom_call.1} parent=5 // pred_fallthru
        _
      %p316 = scmp.lt.s32.totalorder %s21, 2
      // Predicated region
      $region37: #{tpu_custom_call.1} parent=5 // pred_check
        %p317 = pneg %p316
      $region38: #{tpu_custom_call.1} parent=5 // pred_check_branch
        %319 = sbr.rel (%p317) target = $region40
      $region39: #{tpu_custom_call.1} parent=5 // pred_region
        // Predicated region
        $region41: #{tpu_custom_call.1} parent=39 // pred_check
          %p320 = pneg %p55
        $region42: #{tpu_custom_call.1} parent=39 // pred_check_branch
          %322 = sbr.rel (%p320) target = $region44
        $region43: #{tpu_custom_call.1} parent=39 // pred_region
          %p323 = scmp.lt.s32.totalorder %s28, 1
          %s324 = scalar_select %p323, %s28, 1
          %p325 = scmp.lt.s32.totalorder %s29, 0
          %s326 = scalar_select %p325, %s29, 0
          %s327 = sadd.s32 %s326, %s324
          %s328 = smul.addr %s327, 8
          %s329 = scalar_lea.vmem %s0, %s328
        $region44: #{tpu_custom_call.1} parent=39 // pred_fallthru
          _
        // Predicated region
        $region45: #{tpu_custom_call.1} parent=39 // pred_check
          %p330 = pneg %p89
        $region46: #{tpu_custom_call.1} parent=39 // pred_check_branch
          %332 = sbr.rel (%p330) target = $region48
        $region47: #{tpu_custom_call.1} parent=39 // pred_region
          %s333 = ssub.s32 %s29, 1
          %p334 = scmp.gt.s32.totalorder %s333, 0
          %s335 = scalar_select %p334, %s333, 0
          %p336 = scmp.lt.s32.totalorder %s28, 1
          %s337 = scalar_select %p336, %s28, 1
          %p338 = scmp.lt.s32.totalorder %s335, 0
          %s339 = scalar_select %p338, %s335, 0
          %s340 = sadd.s32 %s339, %s337
          %s341 = smul.addr %s340, 8
          %s342 = scalar_lea.vmem %s1, %s341
          %s343 = ssub.s32 %s29, 1
          %p344 = scmp.gt.s32.totalorder %s343, 0
          %s345 = scalar_select %p344, %s343, 0
        $region48: #{tpu_custom_call.1} parent=39 // pred_fallthru
          _
        // Predicated region
        $region49: #{tpu_custom_call.1} parent=39 // pred_check
          %p346 = pneg %p123
        $region50: #{tpu_custom_call.1} parent=39 // pred_check_branch
          %348 = sbr.rel (%p346) target = $region52
        $region51: #{tpu_custom_call.1} parent=39 // pred_region
          %s349 = sand.u32 %s113, 1
          %s350 = scalar_lea.sflag [#allocation3], %s349
          %s351 = sand.u32 %s113, 1
          %s352 = smul.addr %s351, 8
          %s353 = scalar_lea.vmem [#allocation2], %s352
          %s354 = sadd.s32 %s29, 1
          %p355 = scmp.lt.s32.totalorder %s354, 0
          %s356 = scalar_select %p355, %s354, 0
          %s358 = ssub.s32 128, 128
          %359 = vsyncadd %s350, %s358
          %s360 = sadd.s32 %s356, %s28
          %s361 = smul.addr %s360, 128
          %s362 = scalar_lea.hbm %s2, %s361
          %s364 = sshll.u32 %s353, 4
          %s365 = int_to_ptr.vmem [resolvable:$true] %s364
          %367 = dma.hbm_to_vmem [thread:$0]  %s362, 128, %s365, %s350
        $region52: #{tpu_custom_call.1} parent=39 // pred_fallthru
          _
      $region40: #{tpu_custom_call.1} parent=5 // pred_fallthru
        _
      %p368 = scmp.le.s32.totalorder 1, %s21
      %p369 = scmp.lt.s32.totalorder %s21, 3
      %p370 = pnand %p368, %p369
      %p371 = pneg %p370
      // Predicated region
      $region53: #{tpu_custom_call.1} parent=5 // pred_check
        _
      $region54: #{tpu_custom_call.1} parent=5 // pred_check_branch
        %373 = sbr.rel (%p370) target = $region56
      $region55: #{tpu_custom_call.1} parent=5 // pred_region
        %s374 = ssub.s32 %s21, 1
        %s375 = sand.u32 %s116, 1
        %s376 = scalar_lea.sflag [#allocation3], %s375
        %s377 = sand.u32 %s116, 1
        %s378 = smul.addr %s377, 8
        %s379 = scalar_lea.vmem [#allocation2], %s378
        // Predicated region
        $region57: #{tpu_custom_call.1} parent=55 // pred_check
          %p380 = pneg %p129
        $region58: #{tpu_custom_call.1} parent=55 // pred_check_branch
          %382 = sbr.rel (%p380) target = $region60
        $region59: #{tpu_custom_call.1} parent=55 // pred_region
          %383 = dma.done %s376, 128
        $region60: #{tpu_custom_call.1} parent=55 // pred_fallthru
          _
        %p384 = scmp.lt.s32.totalorder %s30, 1
        %s385 = scalar_select %p384, %s30, 1
        %p386 = scmp.lt.s32.totalorder %s31, 0
        %s387 = scalar_select %p386, %s31, 0
        %s388 = sadd.s32 %s387, %s385
        %s389 = smul.addr %s388, 8
        %s390 = scalar_lea.vmem %s0, %s389
        %p391 = pneg %p61
        %p392 = pneg %p58
        %s393 = ssub.s32 %s31, 1
        %p394 = scmp.gt.s32.totalorder %s393, 0
        %s395 = scalar_select %p394, %s393, 0
        %p396 = scmp.lt.s32.totalorder %s30, 1
        %s397 = scalar_select %p396, %s30, 1
        %p398 = scmp.lt.s32.totalorder %s395, 0
        %s399 = scalar_select %p398, %s395, 0
        %s400 = sadd.s32 %s399, %s397
        %s401 = smul.addr %s400, 8
        %s402 = scalar_lea.vmem %s1, %s401
        %p403 = pneg %p95
        %p404 = pneg %p92
        %s405 = sand.u32 %s116, 1
        %s406 = scalar_lea.sflag [#allocation3], %s405
        %s407 = sand.u32 %s116, 1
        %s408 = smul.addr %s407, 8
        %s409 = scalar_lea.vmem [#allocation2], %s408
        %p410 = pneg %p129
        %p411 = pneg %p126
        %p412 = pneg %p150
        %p413 = pneg %p147
        %p414 = pneg %p171
        %p415 = pneg %p168
        %p416 = pneg %p192
        %p417 = pneg %p189
        %p418 = pneg %p213
        %p419 = pneg %p210
        %p420 = pneg %p234
        %p421 = pneg %p231
        %p422 = pneg %p255
        %p423 = pneg %p252
        %p424 = pneg %p283
        %p425 = pneg %p280
        %s426 = sand.u32 %s270, 1
        %s427 = scalar_lea.sflag [#allocation4], %s426
        %s428 = sand.u32 %s270, 1
        %s429 = smul.addr %s428, 8
        %s430 = scalar_lea.vmem [#allocation5], %s429
        %p431 = scmp.lt.s32.totalorder %s30, 1
        %s432 = scalar_select %p431, %s30, 1
        %p433 = scmp.lt.s32.totalorder %s31, 0
        %s434 = scalar_select %p433, %s31, 0
        %s435 = sadd.s32 %s434, %s432
        %s436 = smul.addr %s435, 8
        %s437 = scalar_lea.vmem %s0, %s436
        %s438 = ssub.s32 %s31, 1
        %p439 = scmp.gt.s32.totalorder %s438, 0
        %s440 = scalar_select %p439, %s438, 0
        %p441 = scmp.lt.s32.totalorder %s30, 1
        %s442 = scalar_select %p441, %s30, 1
        %p443 = scmp.lt.s32.totalorder %s440, 0
        %s444 = scalar_select %p443, %s440, 0
        %s445 = sadd.s32 %s444, %s442
        %s446 = smul.addr %s445, 8
        %s447 = scalar_lea.vmem %s1, %s446
        %s448 = ssub.s32 %s31, 1
        %p449 = scmp.gt.s32.totalorder %s448, 0
        %s450 = scalar_select %p449, %s448, 0
        %s451 = sadd.s32 %s31, 1
        %p452 = scmp.lt.s32.totalorder %s451, 0
        %s453 = scalar_select %p452, %s451, 0
        %v454 = vld [vmem:[%s3] sm:$0xff]
        %v455 = vld [vmem:[%s4] sm:$0xff]
        %v456 = vld [vmem:[%s5] sm:$0xff]
        %v457 = vld [vmem:[%s6] sm:$0xff]
        %v458 = vld [vmem:[%s7] sm:$0xff]
        %v459 = vld [vmem:[%s8] sm:$0xff]
        %v460 = vlaneseq
        %v461 = vand.u32 %v460, 127
        %vm462 = vcmp.eq.s32.totalorder %v461, 0
        %vm463 = vcmp.eq.s32.totalorder %v461, 127
        %s464 = smul.u32 %s31, 128
        %v465 = vstv %s464
        %v466 = vadd.s32 %v465, %v461
        %vm467 = vcmp.ge.s32.totalorder %v466, 15
        %vm468 = vmor %vm463, %vm467
        %p469 = scmp.gt.s32.totalorder %s31, 0
        %s470 = scalar_select %p469, 1, 0
        %s471 = scvt.s32.f32 %s470
        %p472 = scmp.lt.s32.totalorder %s31, 0
        %s473 = scalar_select %p472, 1, 0
        %s474 = scvt.s32.f32 %s473
        %v475 = vld [vmem:[%s437] sm:$0xff]
        %477 = vset.pattern.permute.xlu0 0
        %478 = vperm.xlu0 %477, %v455
        %v479 = vpop.permute.xlu0 %478
        %vm481 = vcmask 64512
        %v483 = vsel %vm481, %v454, 0
        %485 = vmatprep.subr.mxu0 0.0
        %486 = vmatpush1.msra.mxu0 %v475
        %487 = vmatprep.subr.mxu0 0.0
        %488 = vmatpush1.msra.mxu0 0.0
        %489 = vmatprep.subr.mxu0 0.0
        %490 = vmatpush1.msra.mxu0 0.0
        %491 = vmatprep.subr.mxu0 0.0
        %492 = vmatpush1.msra.mxu0 0.0
        %493 = vmatprep.subr.mxu0 0.0
        %494 = vmatpush1.msra.mxu0 0.0
        %495 = vmatprep.subr.mxu0 0.0
        %496 = vmatpush1.msra.mxu0 0.0
        %497 = vmatprep.subr.mxu0 0.0
        %498 = vmatpush1.msra.mxu0 0.0
        %499 = vmatprep.subr.mxu0 0.0
        %500 = vmatpush1.msra.mxu0 0.0
        %501 = vmatprep.subr.mxu0 0.0
        %502 = vmatpush1.msra.mxu0 0.0
        %503 = vmatprep.subr.mxu0 0.0
        %504 = vmatpush1.msra.mxu0 0.0
        %505 = vmatprep.subr.mxu0 0.0
        %506 = vmatpush1.msra.mxu0 0.0
        %507 = vmatprep.subr.mxu0 0.0
        %508 = vmatpush1.msra.mxu0 0.0
        %509 = vmatprep.subr.mxu0 0.0
        %510 = vmatpush1.msra.mxu0 0.0
        %511 = vmatprep.subr.mxu0 0.0
        %512 = vmatpush1.msra.mxu0 0.0
        %513 = vmatprep.subr.mxu0 0.0
        %514 = vmatpush1.msra.mxu0 0.0
        %515 = vmatprep.subr.mxu0 0.0
        %516 = vmatpush1.msra.mxu0 0.0
        %517 = vmatprep.subr.mxu0 0.0
        %518 = vmatpush1.msra.mxu0 0.0
        %519 = vmatprep.subr.mxu0 0.0
        %520 = vmatpush1.msra.mxu0 0.0
        %521 = vmatprep.subr.mxu0 0.0
        %522 = vmatpush1.msra.mxu0 0.0
        %523 = vmatprep.subr.mxu0 0.0
        %524 = vmatpush1.msra.mxu0 0.0
        %525 = vmatprep.subr.mxu0 0.0
        %526 = vmatpush1.msra.mxu0 0.0
        %527 = vmatprep.subr.mxu0 0.0
        %528 = vmatpush1.msra.mxu0 0.0
        %529 = vmatprep.subr.mxu0 0.0
        %530 = vmatpush1.msra.mxu0 0.0
        %531 = vmatprep.subr.mxu0 0.0
        %532 = vmatpush1.msra.mxu0 0.0
        %533 = vmatprep.subr.mxu0 0.0
        %534 = vmatpush1.msra.mxu0 0.0
        %535 = vmatprep.subr.mxu0 0.0
        %536 = vmatpush1.msra.mxu0 0.0
        %537 = vmatprep.subr.mxu0 0.0
        %538 = vmatpush1.msra.mxu0 0.0
        %539 = vmatprep.subr.mxu0 0.0
        %540 = vmatpush1.msra.mxu0 0.0
        %541 = vmatprep.subr.mxu0 0.0
        %542 = vmatpush1.msra.mxu0 0.0
        %543 = vmatprep.subr.mxu0 0.0
        %544 = vmatpush1.msra.mxu0 0.0
        %545 = vmatprep.subr.mxu0 0.0
        %546 = vmatpush1.msra.mxu0 0.0
        %547 = vmatprep.subr.mxu0 0.0
        %548 = vmatpush1.msra.mxu0 0.0
        %549 = vmatprep.mubr.f32.mxu0 0.0
        %550 = vmatmul.mubr.f32.gmra.mrb[0].mxu0 %v483
        %v551 = vpop.f32.mrb[0].mxu0
        %v552 = vadd.f32 %v479, %v551
        %v553 = vpop.f32.mrb[0].mxu0
        %554 = vdwg.mxu0
        %v555 = vmul.f32 %v552, 0.5
        %v556 = vmul.f32 %v552, 0.70710677
        %v557 = verf.f32.pop %v556
        %v558 = vadd.f32 %v557, 1.0
        %v559 = vmul.f32 %v555, %v558
        %v560 = vld [vmem:[%s447] sm:$0xff]
        %562 = vrot.lane.b32.xlu0 %v560, 1
        %v563 = vpop.permute.xlu0 %562
        %565 = vmatprep.subr.mxu0 0.0
        %566 = vmatpush1.msra.mxu0 %v563
        %567 = vmatprep.subr.mxu0 0.0
        %568 = vmatpush1.msra.mxu0 0.0
        %569 = vmatprep.subr.mxu0 0.0
        %570 = vmatpush1.msra.mxu0 0.0
        %571 = vmatprep.subr.mxu0 0.0
        %572 = vmatpush1.msra.mxu0 0.0
        %573 = vmatprep.subr.mxu0 0.0
        %574 = vmatpush1.msra.mxu0 0.0
        %575 = vmatprep.subr.mxu0 0.0
        %576 = vmatpush1.msra.mxu0 0.0
        %577 = vmatprep.subr.mxu0 0.0
        %578 = vmatpush1.msra.mxu0 0.0
        %579 = vmatprep.subr.mxu0 0.0
        %580 = vmatpush1.msra.mxu0 0.0
        %581 = vmatprep.subr.mxu0 0.0
        %582 = vmatpush1.msra.mxu0 0.0
        %583 = vmatprep.subr.mxu0 0.0
        %584 = vmatpush1.msra.mxu0 0.0
        %585 = vmatprep.subr.mxu0 0.0
        %586 = vmatpush1.msra.mxu0 0.0
        %587 = vmatprep.subr.mxu0 0.0
        %588 = vmatpush1.msra.mxu0 0.0
        %589 = vmatprep.subr.mxu0 0.0
        %590 = vmatpush1.msra.mxu0 0.0
        %591 = vmatprep.subr.mxu0 0.0
        %592 = vmatpush1.msra.mxu0 0.0
        %593 = vmatprep.subr.mxu0 0.0
        %594 = vmatpush1.msra.mxu0 0.0
        %595 = vmatprep.subr.mxu0 0.0
        %596 = vmatpush1.msra.mxu0 0.0
        %597 = vmatprep.subr.mxu0 0.0
        %598 = vmatpush1.msra.mxu0 0.0
        %599 = vmatprep.subr.mxu0 0.0
        %600 = vmatpush1.msra.mxu0 0.0
        %601 = vmatprep.subr.mxu0 0.0
        %602 = vmatpush1.msra.mxu0 0.0
        %603 = vmatprep.subr.mxu0 0.0
        %604 = vmatpush1.msra.mxu0 0.0
        %605 = vmatprep.subr.mxu0 0.0
        %606 = vmatpush1.msra.mxu0 0.0
        %607 = vmatprep.subr.mxu0 0.0
        %608 = vmatpush1.msra.mxu0 0.0
        %609 = vmatprep.subr.mxu0 0.0
        %610 = vmatpush1.msra.mxu0 0.0
        %611 = vmatprep.subr.mxu0 0.0
        %612 = vmatpush1.msra.mxu0 0.0
        %613 = vmatprep.subr.mxu0 0.0
        %614 = vmatpush1.msra.mxu0 0.0
        %615 = vmatprep.subr.mxu0 0.0
        %616 = vmatpush1.msra.mxu0 0.0
        %617 = vmatprep.subr.mxu0 0.0
        %618 = vmatpush1.msra.mxu0 0.0
        %619 = vmatprep.subr.mxu0 0.0
        %620 = vmatpush1.msra.mxu0 0.0
        %621 = vmatprep.subr.mxu0 0.0
        %622 = vmatpush1.msra.mxu0 0.0
        %623 = vmatprep.subr.mxu0 0.0
        %624 = vmatpush1.msra.mxu0 0.0
        %625 = vmatprep.subr.mxu0 0.0
        %626 = vmatpush1.msra.mxu0 0.0
        %627 = vmatprep.subr.mxu0 0.0
        %628 = vmatpush1.msra.mxu0 0.0
        %629 = vmatprep.mubr.f32.mxu0 0.0
        %630 = vmatmul.mubr.f32.gmra.mrb[0].mxu0 %v483
        %v631 = vpop.f32.mrb[0].mxu0
        %v632 = vadd.f32 %v455, %v631
        %v633 = vpop.f32.mrb[0].mxu0
        %634 = vdwg.mxu0
        %v635 = vld [vmem:[%s379] sm:$0xff]
        %636 = vmatprep.subr.mxu0 0.0
        %637 = vmatpush1.msra.mxu0 %v635
        %638 = vmatprep.subr.mxu0 0.0
        %639 = vmatpush1.msra.mxu0 0.0
        %640 = vmatprep.subr.mxu0 0.0
        %641 = vmatpush1.msra.mxu0 0.0
        %642 = vmatprep.subr.mxu0 0.0
        %643 = vmatpush1.msra.mxu0 0.0
        %644 = vmatprep.subr.mxu0 0.0
        %645 = vmatpush1.msra.mxu0 0.0
        %646 = vmatprep.subr.mxu0 0.0
        %647 = vmatpush1.msra.mxu0 0.0
        %648 = vmatprep.subr.mxu0 0.0
        %649 = vmatpush1.msra.mxu0 0.0
        %650 = vmatprep.subr.mxu0 0.0
        %651 = vmatpush1.msra.mxu0 0.0
        %652 = vmatprep.subr.mxu0 0.0
        %653 = vmatpush1.msra.mxu0 0.0
        %654 = vmatprep.subr.mxu0 0.0
        %655 = vmatpush1.msra.mxu0 0.0
        %656 = vmatprep.subr.mxu0 0.0
        %657 = vmatpush1.msra.mxu0 0.0
        %658 = vmatprep.subr.mxu0 0.0
        %659 = vmatpush1.msra.mxu0 0.0
        %660 = vmatprep.subr.mxu0 0.0
        %661 = vmatpush1.msra.mxu0 0.0
        %662 = vmatprep.subr.mxu0 0.0
        %663 = vmatpush1.msra.mxu0 0.0
        %664 = vmatprep.subr.mxu0 0.0
        %665 = vmatpush1.msra.mxu0 0.0
        %666 = vmatprep.subr.mxu0 0.0
        %667 = vmatpush1.msra.mxu0 0.0
        %668 = vmatprep.subr.mxu0 0.0
        %669 = vmatpush1.msra.mxu0 0.0
        %670 = vmatprep.subr.mxu0 0.0
        %671 = vmatpush1.msra.mxu0 0.0
        %672 = vmatprep.subr.mxu0 0.0
        %673 = vmatpush1.msra.mxu0 0.0
        %674 = vmatprep.subr.mxu0 0.0
        %675 = vmatpush1.msra.mxu0 0.0
        %676 = vmatprep.subr.mxu0 0.0
        %677 = vmatpush1.msra.mxu0 0.0
        %678 = vmatprep.subr.mxu0 0.0
        %679 = vmatpush1.msra.mxu0 0.0
        %680 = vmatprep.subr.mxu0 0.0
        %681 = vmatpush1.msra.mxu0 0.0
        %682 = vmatprep.subr.mxu0 0.0
        %683 = vmatpush1.msra.mxu0 0.0
        %684 = vmatprep.subr.mxu0 0.0
        %685 = vmatpush1.msra.mxu0 0.0
        %686 = vmatprep.subr.mxu0 0.0
        %687 = vmatpush1.msra.mxu0 0.0
        %688 = vmatprep.subr.mxu0 0.0
        %689 = vmatpush1.msra.mxu0 0.0
        %690 = vmatprep.subr.mxu0 0.0
        %691 = vmatpush1.msra.mxu0 0.0
        %692 = vmatprep.subr.mxu0 0.0
        %693 = vmatpush1.msra.mxu0 0.0
        %694 = vmatprep.subr.mxu0 0.0
        %695 = vmatpush1.msra.mxu0 0.0
        %696 = vmatprep.subr.mxu0 0.0
        %697 = vmatpush1.msra.mxu0 0.0
        %698 = vmatprep.subr.mxu0 0.0
        %699 = vmatpush1.msra.mxu0 0.0
        %700 = vmatprep.mubr.f32.mxu0 0.0
        %701 = vmatmul.mubr.f32.gmra.mrb[0].mxu0 %v483
        %v702 = vpop.f32.mrb[0].mxu0
        %v703 = vadd.f32 %v455, %v702
        %v704 = vpop.f32.mrb[0].mxu0
        %705 = vdwg.mxu0
        %v706 = vmul.f32 %v632, 0.5
        %v707 = vmul.f32 %v632, 0.70710677
        %v708 = verf.f32.pop %v707
        %v709 = vadd.f32 %v708, 1.0
        %v710 = vmul.f32 %v706, %v709
        %v711 = vstv %s471
        %v712 = vmul.f32 %v710, %v711
        %v713 = vmul.f32 %v703, 0.5
        %v714 = vmul.f32 %v703, 0.70710677
        %v715 = verf.f32.pop %v714
        %v716 = vadd.f32 %v715, 1.0
        %v717 = vmul.f32 %v713, %v716
        %v718 = vstv %s474
        %v719 = vmul.f32 %v717, %v718
        %720 = vrot.lane.b32.xlu0 %v559, 1
        %v721 = vpop.permute.xlu0 %720
        %723 = vset.pattern.permute.xlu0 0
        %724 = vperm.xlu0 %723, %v712
        %v725 = vpop.permute.xlu0 %724
        %v727 = vsel %vm462, %v725, %v721
        %728 = vrot.lane.b32.xlu0 %v559, 127
        %v729 = vpop.permute.xlu0 %728
        %731 = vset.pattern.permute.xlu0 0
        %732 = vperm.xlu0 %731, %v719
        %v733 = vpop.permute.xlu0 %732
        %v735 = vsel %vm468, %v733, %v729
        %737 = vset.pattern.permute.xlu0 0
        %738 = vperm.xlu0 %737, %v456
        %v739 = vpop.permute.xlu0 %738
        %v741 = vmul.f32 %v727, %v739
        %742 = vset.pattern.permute.xlu0 1
        %743 = vperm.xlu0 %742, %v456
        %v744 = vpop.permute.xlu0 %743
        %v746 = vmul.f32 %v559, %v744
        %v747 = vadd.f32 %v741, %v746
        %748 = vset.pattern.permute.xlu0 2
        %749 = vperm.xlu0 %748, %v456
        %v750 = vpop.permute.xlu0 %749
        %v752 = vmul.f32 %v735, %v750
        %v753 = vadd.f32 %v747, %v752
        %755 = vset.pattern.permute.xlu0 0
        %756 = vperm.xlu0 %755, %v457
        %v757 = vpop.permute.xlu0 %756
        %v759 = vadd.f32 %v753, %v757
        %v760 = vmax.f32 %v759, 0.0
        %762 = vset.pattern.permute.xlu0 0
        %763 = vperm.xlu0 %762, %v459
        %v764 = vpop.permute.xlu0 %763
        %v767 = vsel %vm481, %v458, 0
        %769 = vmatprep.subr.mxu0 0.0
        %770 = vmatpush1.msra.mxu0 %v760
        %771 = vmatprep.subr.mxu0 0.0
        %772 = vmatpush1.msra.mxu0 0.0
        %773 = vmatprep.subr.mxu0 0.0
        %774 = vmatpush1.msra.mxu0 0.0
        %775 = vmatprep.subr.mxu0 0.0
        %776 = vmatpush1.msra.mxu0 0.0
        %777 = vmatprep.subr.mxu0 0.0
        %778 = vmatpush1.msra.mxu0 0.0
        %779 = vmatprep.subr.mxu0 0.0
        %780 = vmatpush1.msra.mxu0 0.0
        %781 = vmatprep.subr.mxu0 0.0
        %782 = vmatpush1.msra.mxu0 0.0
        %783 = vmatprep.subr.mxu0 0.0
        %784 = vmatpush1.msra.mxu0 0.0
        %785 = vmatprep.subr.mxu0 0.0
        %786 = vmatpush1.msra.mxu0 0.0
        %787 = vmatprep.subr.mxu0 0.0
        %788 = vmatpush1.msra.mxu0 0.0
        %789 = vmatprep.subr.mxu0 0.0
        %790 = vmatpush1.msra.mxu0 0.0
        %791 = vmatprep.subr.mxu0 0.0
        %792 = vmatpush1.msra.mxu0 0.0
        %793 = vmatprep.subr.mxu0 0.0
        %794 = vmatpush1.msra.mxu0 0.0
        %795 = vmatprep.subr.mxu0 0.0
        %796 = vmatpush1.msra.mxu0 0.0
        %797 = vmatprep.subr.mxu0 0.0
        %798 = vmatpush1.msra.mxu0 0.0
        %799 = vmatprep.subr.mxu0 0.0
        %800 = vmatpush1.msra.mxu0 0.0
        %801 = vmatprep.subr.mxu0 0.0
        %802 = vmatpush1.msra.mxu0 0.0
        %803 = vmatprep.subr.mxu0 0.0
        %804 = vmatpush1.msra.mxu0 0.0
        %805 = vmatprep.subr.mxu0 0.0
        %806 = vmatpush1.msra.mxu0 0.0
        %807 = vmatprep.subr.mxu0 0.0
        %808 = vmatpush1.msra.mxu0 0.0
        %809 = vmatprep.subr.mxu0 0.0
        %810 = vmatpush1.msra.mxu0 0.0
        %811 = vmatprep.subr.mxu0 0.0
        %812 = vmatpush1.msra.mxu0 0.0
        %813 = vmatprep.subr.mxu0 0.0
        %814 = vmatpush1.msra.mxu0 0.0
        %815 = vmatprep.subr.mxu0 0.0
        %816 = vmatpush1.msra.mxu0 0.0
        %817 = vmatprep.subr.mxu0 0.0
        %818 = vmatpush1.msra.mxu0 0.0
        %819 = vmatprep.subr.mxu0 0.0
        %820 = vmatpush1.msra.mxu0 0.0
        %821 = vmatprep.subr.mxu0 0.0
        %822 = vmatpush1.msra.mxu0 0.0
        %823 = vmatprep.subr.mxu0 0.0
        %824 = vmatpush1.msra.mxu0 0.0
        %825 = vmatprep.subr.mxu0 0.0
        %826 = vmatpush1.msra.mxu0 0.0
        %827 = vmatprep.subr.mxu0 0.0
        %828 = vmatpush1.msra.mxu0 0.0
        %829 = vmatprep.subr.mxu0 0.0
        %830 = vmatpush1.msra.mxu0 0.0
        %831 = vmatprep.subr.mxu0 0.0
        %832 = vmatpush1.msra.mxu0 0.0
        %833 = vmatprep.mubr.f32.mxu0 0.0
        %834 = vmatmul.mubr.f32.gmra.mrb[0].mxu0 %v767
        %v835 = vpop.f32.mrb[0].mxu0
        %v836 = vadd.f32 %v764, %v835
        %v837 = vpop.f32.mrb[0].mxu0
        %838 = vdwg.mxu0
        %839 = vst [vmem:[%s430] sm:$0xff] %v836
        %s840 = sand.u32 %s270, 1
        %s841 = scalar_lea.sflag [#allocation4], %s840
        %s842 = sand.u32 %s270, 1
        %s843 = smul.addr %s842, 8
        %s844 = scalar_lea.vmem [#allocation5], %s843
        // Predicated region
        $region61: #{tpu_custom_call.1} parent=55 // pred_check
          %p845 = pneg %p280
        $region62: #{tpu_custom_call.1} parent=55 // pred_check_branch
          %847 = sbr.rel (%p845) target = $region64
        $region63: #{tpu_custom_call.1} parent=55 // pred_region
          %s849 = ssub.s32 128, 128
          %850 = vsyncadd %s841, %s849
          %s851 = sadd.s32 %s31, %s30
          %s852 = smul.addr %s851, 128
          %s853 = scalar_lea.hbm %s9, %s852
          %s855 = sshll.u32 %s844, 4
          %s856 = int_to_ptr.vmem [resolvable:$true] %s855
          %858 = dma.vmem_to_hbm [thread:$0]  %s856, 128, %s853, %s841
        $region64: #{tpu_custom_call.1} parent=55 // pred_fallthru
          _
      $region56: #{tpu_custom_call.1} parent=5 // pred_fallthru
        _
      %p859 = scmp.le.s32.totalorder 2, %s21
      // Predicated region
      $region65: #{tpu_custom_call.1} parent=5 // pred_check
        %p860 = pneg %p859
      $region66: #{tpu_custom_call.1} parent=5 // pred_check_branch
        %862 = sbr.rel (%p860) target = $region68
      $region67: #{tpu_custom_call.1} parent=5 // pred_region
        %s863 = ssub.s32 %s21, 2
        // Predicated region
        $region69: #{tpu_custom_call.1} parent=67 // pred_check
          %p864 = pneg %p286
        $region70: #{tpu_custom_call.1} parent=67 // pred_check_branch
          %866 = sbr.rel (%p864) target = $region72
        $region71: #{tpu_custom_call.1} parent=67 // pred_region
          %s867 = sand.u32 %s271, 1
          %s868 = scalar_lea.sflag [#allocation4], %s867
          %s869 = sand.u32 %s271, 1
          %s870 = smul.addr %s869, 8
          %s871 = scalar_lea.vmem [#allocation5], %s870
          %872 = dma.done %s868, 128
        $region72: #{tpu_custom_call.1} parent=67 // pred_fallthru
          _
      $region68: #{tpu_custom_call.1} parent=5 // pred_fallthru
        _
    $region6: #{tpu_custom_call.1} parent=1 // loop_footer
      %s25 = sadd.s32 1, %s21
    $region7: #{tpu_custom_call.1} parent=1 // loop_footer_branch
      %20 = sbr.rel target = $region3
    $region8: #{tpu_custom_call.1} parent=1 // loop_exit
      _
    %873 = vsyncpa [#allocation3], 1
    %s874 = scalar_lea.sflag [#allocation3], 1
    %875 = vsyncpa %s874, 1
    %876 = vsyncpa [#allocation4], 1
    %s877 = scalar_lea.sflag [#allocation4], 1
    %878 = vsyncpa %s877, 1

</llo_original>
